<compile_context>
chip_gen: v7x
topology: tpu7x:2x2x1
jax: 0.10.0
libtpu: 0.0.40
codegen_flags: <defaults>
</compile_context>

<pallas_src>
import functools
import math

import jax
import jax.numpy as jnp
from jax.experimental import pallas as pl
from jax.experimental.pallas import tpu as pltpu

LOG10 = math.log(10.0)
TWO_PI = 2.0 * math.pi


def _scale_fn(x):
    # DDSP scale_function(x) = 2 * sigmoid(x)**log(10) + 1e-7
    sig = jax.nn.sigmoid(x)
    return 2.0 * jnp.exp(LOG10 * jnp.log(jnp.maximum(sig, 1e-30))) + 1e-7


# ---------------------------------------------------------------------------
# Kernel 1: Mel2Control MLP + scale_function + amplitude normalisation
# TODO(synk): Mel2Control's conv stack + PCmer transformer are replaced by a
#             deterministic 2-layer MLP (functional stand-in, not the real net).
# ---------------------------------------------------------------------------
def _mel2ctrl_kernel(x_ref, w1_ref, b1_ref, w2_ref, b2_ref, out_ref, *, n_harm):
    x = x_ref[...]                                                    # (tile_r, n_in)
    h = jnp.dot(x, w1_ref[...], preferred_element_type=jnp.float32) + b1_ref[...]
    h = jnp.where(h > 0.0, h, 0.2 * h)                                # LeakyReLU
    ctrl = jnp.dot(h, w2_ref[...], preferred_element_type=jnp.float32) + b2_ref[...]
    ctrl = _scale_fn(ctrl)                                            # (tile_r, n_out_pad)

    # column masks: col 0 = 'A', cols [1, 1+n_harm) = 'amplitudes'
    col = jax.lax.broadcasted_iota(jnp.int32, ctrl.shape, 1)
    is_a = (col == 0)
    is_amp = jnp.logical_and(col >= 1, col < 1 + n_harm)

    a_val = jnp.sum(jnp.where(is_a, ctrl, 0.0), axis=-1, keepdims=True)      # A
    amp_sum = jnp.sum(jnp.where(is_amp, ctrl, 0.0), axis=-1, keepdims=True)  # sum(amps)
    factor = a_val / amp_sum                                          # A / sum

    # amplitudes /= sum; amplitudes *= A   (only amp columns scaled)
    out_ref[...] = ctrl * jnp.where(is_amp, factor, 1.0)


def _plan_rows(R, max_rows=256):
    """Row tile and padded row count (no full-extent fallback)."""
    if R <= max_rows:
        tile = max(8, ((R + 7) // 8) * 8)
        return tile, tile
    tile = max_rows
    r_pad = ((R + tile - 1) // tile) * tile
    return tile, r_pad


def mel2ctrl(x, w1, b1, w2, b2, n_harm, n_mag):
    R, n_in = x.shape
    H = w1.shape[1]
    n_out_pad = w2.shape[1]                       # padded to a multiple of 128
    tile_r, r_pad = _plan_rows(R)
    if r_pad != R:
        x = jnp.pad(x, ((0, r_pad - R), (0, 0)))

    kernel = functools.partial(_mel2ctrl_kernel, n_harm=n_harm)
    out = pl.pallas_call(
        kernel,
        out_shape=jax.ShapeDtypeStruct((r_pad, n_out_pad), jnp.float32),
        grid=(r_pad // tile_r,),
        in_specs=[pl.BlockSpec((tile_r, n_in), lambda i: (i, 0)),
                  pl.BlockSpec((n_in, H), lambda i: (0, 0)),
                  pl.BlockSpec((1, H), lambda i: (0, 0)),
                  pl.BlockSpec((H, n_out_pad), lambda i: (0, 0)),
                  pl.BlockSpec((1, n_out_pad), lambda i: (0, 0))],
        out_specs=pl.BlockSpec((tile_r, n_out_pad), lambda i: (i, 0)),
        compiler_params=pltpu.CompilerParams(dimension_semantics=("parallel",)),
    )(x, w1, b1, w2, b2)

    out = out[:R]
    amps = out[:, 1:1 + n_harm]                   # already normalised & * A
    nmag = out[:, 1 + n_harm:1 + n_harm + n_mag]
    return amps, nmag


# ---------------------------------------------------------------------------
# Kernel 2: HarmonicOscillator sinusoid bank (sample-rate hot path)
#   Layout: frames on sublanes, within-frame sample offsets on lanes.
#   - phase computed in-kernel from frame-rate (off, f0, df0) via the exact
#     closed-form quadratic cumulative sum of the linearly-upsampled f0.
#   - harmonics generated with the Chebyshev recurrence from one sin/cos.
#   - amplitude interpolation = final (1-w)/w blend of two accumulators.
# ---------------------------------------------------------------------------
def _harmonic_kernel(ac_ref, an_ref, scal_ref, out_ref,
                     *, n_harm, block_size, inv_sr):
    ac = ac_ref[0]                               # (F, n_harm) current-frame amps (Nyquist-masked)
    an = an_ref[0]                               # (F, n_harm) next-frame amps
    scal = scal_ref[0]                           # (F, 3): [phase_off01, f0, df0]
    off = scal[:, 0:1]                           # (F, 1)
    f0v = scal[:, 1:2]
    dfv = scal[:, 2:3]

    inv_bs = 1.0 / float(block_size)
    j = jax.lax.broadcasted_iota(jnp.int32, (1, block_size), 1).astype(jnp.float32)
    jp1 = j + 1.0
    c1 = jp1 * inv_sr                            # (j+1)/sr
    c2 = j * jp1 * (0.5 * inv_bs * inv_sr)       # j(j+1)/(2*bs*sr)
    w = j * inv_bs                               # interp weight in [0,1)

    # inclusive cumulative phase (cycles) within frame + per-frame offset
    ph01 = off + f0v * c1 + dfv * c2             # (F, block_size)
    ph01 = ph01 - jnp.floor(ph01)                # wrap; sin(k*2π*ph) unchanged (k integer)
    ang = TWO_PI * ph01
    s_cur = jnp.sin(ang)                         # sin(φ)
    twoc = 2.0 * jnp.cos(ang)                    # 2 cos(φ) for the recurrence
    s_prev = jnp.zeros_like(s_cur)               # sin(0·φ)

    acc_c = jnp.zeros_like(s_cur)
    acc_n = jnp.zeros_like(s_cur)
    for k in range(n_harm):                      # static unroll, n_harm is small
        acc_c = acc_c + ac[:, k:k + 1] * s_cur
        acc_n = acc_n + an[:, k:k + 1] * s_cur
        if k + 1 < n_harm:
            s_prev, s_cur = s_cur, twoc * s_cur - s_prev

    out_ref[0] = acc_c * (1.0 - w) + acc_n * w   # frame->sample amp interpolation


def _plan_time_tiling(T, block_size, target_tile_t=16384):
    """frames_per_tile (multiple of 8) and padded frame count."""
    f = max(1, target_tile_t // block_size)
    f = max(8, (f // 8) * 8)
    t_pad8 = ((T + 7) // 8) * 8
    f = min(f, t_pad8)
    t_pad = ((T + f - 1) // f) * f
    return f, t_pad


def harmonic_synth(amp_cur, amp_nxt, scal, block_size, sampling_rate,
                   target_tile_t=16384):
    """amp_cur/amp_nxt: (B, T, n_harm); scal: (B, T, 3) = [off01, f0, df0]."""
    B, T, n_harm = amp_cur.shape
    f, t_pad = _plan_time_tiling(T, block_size, target_tile_t)
    if t_pad != T:
        pad = ((0, 0), (0, t_pad - T), (0, 0))
        amp_cur = jnp.pad(amp_cur, pad)
        amp_nxt = jnp.pad(amp_nxt, pad)
        scal = jnp.pad(scal, pad)

    kernel = functools.partial(_harmonic_kernel, n_harm=n_harm,
                               block_size=block_size,
                               inv_sr=1.0 / float(sampling_rate))
    out = pl.pallas_call(
        kernel,
        out_shape=jax.ShapeDtypeStruct((B, t_pad, block_size), jnp.float32),
        grid=(B, t_pad // f),
        in_specs=[
            pl.BlockSpec((1, f, n_harm), lambda b, t: (b, t, 0)),
            pl.BlockSpec((1, f, n_harm), lambda b, t: (b, t, 0)),
            pl.BlockSpec((1, f, 3), lambda b, t: (b, t, 0)),
        ],
        out_specs=pl.BlockSpec((1, f, block_size), lambda b, t: (b, t, 0)),
        compiler_params=pltpu.CompilerParams(
            dimension_semantics=("parallel", "parallel")),
    )(amp_cur, amp_nxt, scal)

    out = out[:, :T]
    return out.reshape(B, T * block_size)


# ---------------------------------------------------------------------------
# Model wrapper
# ---------------------------------------------------------------------------
class SinsPallas:
    """Pallas/JAX re-implementation of ddsp.vocoder.Sins.forward."""

    def __init__(self, sampling_rate, block_size, n_harmonics, n_mag_noise,
                 n_mels=80, hidden=32, param_key=None):
        self.sampling_rate = float(sampling_rate)
        self.block_size = int(block_size)
        self.n_harmonics = int(n_harmonics)
        self.n_mag_noise = int(n_mag_noise)
        self.n_mels = int(n_mels)
        n_in = n_mels + 1                       # [mel, log1p(f0)]
        n_out = 1 + n_harmonics + n_mag_noise   # {'A':1,'amplitudes':H,'noise_magnitude':M}
        n_out_pad = ((n_out + 127) // 128) * 128  # lane-dense output slab
        self.n_out = n_out
        if param_key is None:
            param_key = jax.random.PRNGKey(42)
        k1, k2 = jax.random.split(param_key)
        self.w1 = 0.1 * jax.random.normal(k1, (n_in, hidden), dtype=jnp.float32)
        self.b1 = jnp.zeros((1, hidden), dtype=jnp.float32)
        w2_real = 0.1 * jax.random.normal(k2, (hidden, n_out), dtype=jnp.float32)
        self.w2 = jnp.zeros((hidden, n_out_pad), dtype=jnp.float32).at[:, :n_out].set(w2_real)
        self.b2 = jnp.zeros((1, n_out_pad), dtype=jnp.float32)

    def __call__(self, mel, f0, initial_phase=None, max_upsample_dim=32,
                 noise_key=None):
        # max_upsample_dim is a memory-chunking knob in the torch code; Pallas
        # tiling over the time axis already bounds memory, so it is unused here.
        B, T, _ = mel.shape
        bs = self.block_size
        sr = self.sampling_rate
        n_samples = T * bs

        # ---- mel2ctrl + scale_function + amplitude normalisation (Pallas) ----
        x = jnp.concatenate([mel, jnp.log1p(f0)], axis=-1).reshape(B * T, -1)
        amps_flat, nmag_flat = mel2ctrl(x, self.w1, self.b1, self.w2, self.b2,
                                        self.n_harmonics, self.n_mag_noise)
        amplitudes = amps_flat.reshape(B, T, self.n_harmonics)   # frame rate
        noise_param = nmag_flat.reshape(B, T, self.n_mag_noise)

        # ---- frame-rate prep for the harmonic synthesiser (all tiny) ----
        if initial_phase is None:
            initial_phase = jnp.zeros((B, 1, 1), dtype=jnp.float32)
        f0_frames = f0[..., 0]                                    # (B, T)
        f0_next = jnp.concatenate([f0_frames[:, 1:], f0_frames[:, -1:]], axis=1)
        df0 = f0_next - f0_frames

        # Nyquist anti-alias mask at frame rate (review: per-sample mask
        # replaced by frame-rate masking; interpolation ramps across frames).
        k_idx = jnp.arange(1, self.n_harmonics + 1, dtype=jnp.float32)
        nyq = sr / 2.0
        mask = (f0_frames[..., None] * k_idx < nyq).astype(jnp.float32)
        amps_masked = amplitudes * mask
        amps_next = jnp.concatenate([amps_masked[:, 1:], amps_masked[:, -1:]], axis=1)

        # Per-frame phase offsets (exclusive cumsum of per-frame phase totals,
        # wrapped per frame to limit f32 drift).  Within-frame phase is the
        # exact quadratic closed form, evaluated in-kernel.
        tot = (f0_frames * bs + df0 * ((bs - 1) / 2.0)) / sr       # cycles/frame
        tot_w = jnp.mod(tot, 1.0)
        off = jnp.mod(jnp.cumsum(tot_w, axis=1) - tot_w, 1.0)      # exclusive
        off = jnp.mod(off + initial_phase.reshape(B, 1) / TWO_PI, 1.0)
        final01 = jnp.mod(off[:, -1] + tot_w[:, -1], 1.0)
        final_phase = (TWO_PI * final01).reshape(B, 1, 1)
        scal = jnp.stack([off, f0_frames, df0], axis=-1)           # (B, T, 3)

        # ---- harmonic synthesiser (phase + amp upsample fused in-kernel) ----
        harmonic = harmonic_synth(amps_masked, amps_next, scal, bs, sr)

        # ---- filtered noise ----
        if noise_key is None:
            noise_key = jax.random.PRNGKey(1)
        noise = jax.random.uniform(noise_key, harmonic.shape,
                                   dtype=jnp.float32) * 2.0 - 1.0
        # TODO(synk): frequency_filter's overlap-add fft_convolve has no clean
        # Pallas equivalent; simplified to per-frame zero-phase spectral
        # filtering kept in plain-JAX jnp.fft glue.
        n_bins = bs // 2 + 1
        if noise_param.shape[-1] != n_bins:
            mag = jax.image.resize(noise_param, (B, T, n_bins), method="linear")
        else:
            mag = noise_param
        spec = jnp.fft.rfft(noise.reshape(B, T, bs), axis=-1)
        noise_f = jnp.fft.irfft(spec * mag, n=bs, axis=-1)
        noise_f = noise_f.reshape(B, n_samples).astype(jnp.float32)

        signal = harmonic + noise_f
        return signal, final_phase, (harmonic, noise_f)


if __name__ == "__main__":
    key = jax.random.PRNGKey(0)
    k_mel, k_f0, k_noise, k_param = jax.random.split(key, 4)

    B, T = 2, 8
    n_mels = 80
    sampling_rate = 16000
    block_size = 128                       # lane-dense output stores
    n_harmonics = 16
    n_mag_noise = block_size // 2 + 1      # 65

    mel = jax.random.normal(k_mel, (B, T, n_mels), dtype=jnp.float32)
    f0 = 100.0 + 300.0 * jax.random.uniform(k_f0, (B, T, 1), dtype=jnp.float32)

    model = SinsPallas(sampling_rate, block_size, n_harmonics, n_mag_noise,
                       n_mels=n_mels, param_key=k_param)
    signal, final_phase, (harmonic, noise) = model(mel, f0, noise_key=k_noise)
    jax.block_until_ready((signal, final_phase, harmonic, noise))

    assert signal.shape == (B, T * block_size)
    assert final_phase.shape == (B, 1, 1)
    assert harmonic.shape == (B, T * block_size)
    assert noise.shape == (B, T * block_size)
    assert bool(jnp.all(jnp.isfinite(signal)))
    assert bool(jnp.all(jnp.isfinite(harmonic)))
    assert bool(jnp.all(jnp.isfinite(final_phase)))
    print("KERNEL_OK")
</pallas_src>

<mosaic_0001>
module attributes {stable_mosaic.version = 11 : i64} {
  func.func @_mel2ctrl_kernel(%arg0: i32, %arg1: memref<16x81xf32, #tpu.memory_space<vmem>>, %arg2: memref<81x32xf32, #tpu.memory_space<vmem>>, %arg3: memref<1x32xf32, #tpu.memory_space<vmem>>, %arg4: memref<32x128xf32, #tpu.memory_space<vmem>>, %arg5: memref<1x128xf32, #tpu.memory_space<vmem>>, %arg6: memref<16x128xf32, #tpu.memory_space<vmem>>) attributes {dimension_semantics = [#tpu.dimension_semantics<parallel>], iteration_bounds = array<i64: 1>, scalar_prefetch = 0 : i64, scratch_operands = 0 : i64, tpu.core_type = #tpu.core_type<tc>, window_params = [{transform_indices = @transform_0, window_bounds = array<i64: 16, 81>}, {pipeline_mode = #tpu.pipeline_mode<synchronous>, transform_indices = @transform_1, window_bounds = array<i64: 81, 32>}, {pipeline_mode = #tpu.pipeline_mode<synchronous>, transform_indices = @transform_2, window_bounds = array<i64: 1, 32>}, {pipeline_mode = #tpu.pipeline_mode<synchronous>, transform_indices = @transform_3, window_bounds = array<i64: 32, 128>}, {pipeline_mode = #tpu.pipeline_mode<synchronous>, transform_indices = @transform_4, window_bounds = array<i64: 1, 128>}, {transform_indices = @transform_5, window_bounds = array<i64: 16, 128>}]} {
    %c0 = arith.constant 0 : index
    %c0_0 = arith.constant 0 : index
    %0 = vector.load %arg1[%c0, %c0_0] : memref<16x81xf32, #tpu.memory_space<vmem>>, vector<16x81xf32>
    %c0_1 = arith.constant 0 : index
    %c0_2 = arith.constant 0 : index
    %1 = vector.load %arg2[%c0_1, %c0_2] : memref<81x32xf32, #tpu.memory_space<vmem>>, vector<81x32xf32>
    %cst = arith.constant dense<0.000000e+00> : vector<16x32xf32>
    %2 = tpu.matmul %0, %1, %cst {dimension_numbers = #tpu.dot_dimension_numbers<[1], [0], [0], [1], [0, 0, 1, 1], [], []>} : vector<16x81xf32>, vector<81x32xf32>, vector<16x32xf32> -> vector<16x32xf32>
    %c0_3 = arith.constant 0 : index
    %c0_4 = arith.constant 0 : index
    %3 = vector.load %arg3[%c0_3, %c0_4] : memref<1x32xf32, #tpu.memory_space<vmem>>, vector<1x32xf32>
    %4 = vector.broadcast %3 : vector<1x32xf32> to vector<16x32xf32>
    %5 = arith.addf %2, %4 : vector<16x32xf32>
    %cst_5 = arith.constant 0.000000e+00 : f32
    %6 = vector.broadcast %cst_5 : f32 to vector<16x32xf32>
    %7 = arith.cmpf ogt, %5, %6 : vector<16x32xf32>
    %cst_6 = arith.constant 2.000000e-01 : f32
    %8 = vector.broadcast %cst_6 : f32 to vector<16x32xf32>
    %9 = arith.mulf %8, %5 : vector<16x32xf32>
    %10 = arith.select %7, %5, %9 : vector<16x32xi1>, vector<16x32xf32>
    %c0_7 = arith.constant 0 : index
    %c0_8 = arith.constant 0 : index
    %11 = vector.load %arg4[%c0_7, %c0_8] : memref<32x128xf32, #tpu.memory_space<vmem>>, vector<32x128xf32>
    %cst_9 = arith.constant dense<0.000000e+00> : vector<16x128xf32>
    %12 = tpu.matmul %10, %11, %cst_9 {dimension_numbers = #tpu.dot_dimension_numbers<[1], [0], [0], [1], [0, 0, 1, 1], [], []>} : vector<16x32xf32>, vector<32x128xf32>, vector<16x128xf32> -> vector<16x128xf32>
    %c0_10 = arith.constant 0 : index
    %c0_11 = arith.constant 0 : index
    %13 = vector.load %arg5[%c0_10, %c0_11] : memref<1x128xf32, #tpu.memory_space<vmem>>, vector<1x128xf32>
    %14 = vector.broadcast %13 : vector<1x128xf32> to vector<16x128xf32>
    %15 = arith.addf %12, %14 : vector<16x128xf32>
    %16 = arith.negf %15 : vector<16x128xf32>
    %17 = math.exp %16 : vector<16x128xf32>
    %cst_12 = arith.constant 1.000000e+00 : f32
    %18 = vector.broadcast %cst_12 : f32 to vector<16x128xf32>
    %19 = arith.addf %18, %17 : vector<16x128xf32>
    %20 = arith.divf %18, %19 : vector<16x128xf32>
    %cst_13 = arith.constant 1.000000e-30 : f32
    %21 = vector.broadcast %cst_13 : f32 to vector<16x128xf32>
    %22 = arith.maximumf %20, %21 : vector<16x128xf32>
    %23 = math.log %22 : vector<16x128xf32>
    %cst_14 = arith.constant 2.30258512 : f32
    %24 = vector.broadcast %cst_14 : f32 to vector<16x128xf32>
    %25 = arith.mulf %24, %23 : vector<16x128xf32>
    %26 = math.exp %25 : vector<16x128xf32>
    %cst_15 = arith.constant 2.000000e+00 : f32
    %27 = vector.broadcast %cst_15 : f32 to vector<16x128xf32>
    %28 = arith.mulf %27, %26 : vector<16x128xf32>
    %cst_16 = arith.constant 1.000000e-07 : f32
    %29 = vector.broadcast %cst_16 : f32 to vector<16x128xf32>
    %30 = arith.addf %28, %29 : vector<16x128xf32>
    %31 = tpu.iota {dimensions = array<i32: 1>} : vector<16x128xi32>
    %c0_i32 = arith.constant 0 : i32
    %32 = vector.broadcast %c0_i32 : i32 to vector<16x128xi32>
    %33 = arith.cmpi eq, %31, %32 : vector<16x128xi32>
    %c1_i32 = arith.constant 1 : i32
    %34 = vector.broadcast %c1_i32 : i32 to vector<16x128xi32>
    %35 = arith.cmpi sge, %31, %34 : vector<16x128xi32>
    %c17_i32 = arith.constant 17 : i32
    %36 = vector.broadcast %c17_i32 : i32 to vector<16x128xi32>
    %37 = arith.cmpi slt, %31, %36 : vector<16x128xi32>
    %38 = arith.andi %35, %37 : vector<16x128xi1>
    %cst_17 = arith.constant 0.000000e+00 : f32
    %39 = vector.broadcast %cst_17 : f32 to vector<16x128xf32>
    %40 = arith.select %33, %30, %39 : vector<16x128xi1>, vector<16x128xf32>
    %cst_18 = arith.constant dense<0.000000e+00> : vector<16xf32>
    %41 = vector.multi_reduction <add>, %40, %cst_18 [1] : vector<16x128xf32> to vector<16xf32>
    %42 = vector.shape_cast %41 : vector<16xf32> to vector<16x1xf32>
    %cst_19 = arith.constant 0.000000e+00 : f32
    %43 = vector.broadcast %cst_19 : f32 to vector<16x128xf32>
    %44 = arith.select %38, %30, %43 : vector<16x128xi1>, vector<16x128xf32>
    %cst_20 = arith.constant dense<0.000000e+00> : vector<16xf32>
    %45 = vector.multi_reduction <add>, %44, %cst_20 [1] : vector<16x128xf32> to vector<16xf32>
    %46 = vector.shape_cast %45 : vector<16xf32> to vector<16x1xf32>
    %47 = arith.divf %42, %46 : vector<16x1xf32>
    %cst_21 = arith.constant 1.000000e+00 : f32
    %48 = vector.shape_cast %47 : vector<16x1xf32> to vector<16x1xf32>
    %49 = vector.broadcast %48 : vector<16x1xf32> to vector<16x128xf32>
    %50 = vector.broadcast %cst_21 : f32 to vector<16x128xf32>
    %51 = arith.select %38, %49, %50 : vector<16x128xi1>, vector<16x128xf32>
    %52 = arith.mulf %30, %51 : vector<16x128xf32>
    %c0_22 = arith.constant 0 : index
    %c0_23 = arith.constant 0 : index
    %53 = vector.load %arg6[%c0_22, %c0_23] : memref<16x128xf32, #tpu.memory_space<vmem>>, vector<16x128xf32>
    tpu.vector_store %arg6[%c0_22, %c0_23], %52 {strides = array<i32>} : memref<16x128xf32, #tpu.memory_space<vmem>>, vector<16x128xf32>,
    return
  }
  func.func @transform_0(%arg0: i32) -> (i32, i32) {
    %c0_i32 = arith.constant 0 : i32
    %c0_i32_0 = arith.constant 0 : i32
    return %arg0, %c0_i32 : i32, i32
  }
  func.func @transform_1(%arg0: i32) -> (i32, i32) {
    %c0_i32 = arith.constant 0 : i32
    %c0_i32_0 = arith.constant 0 : i32
    %c0_i32_1 = arith.constant 0 : i32
    return %c0_i32, %c0_i32_0 : i32, i32
  }
  func.func @transform_2(%arg0: i32) -> (i32, i32) {
    %c0_i32 = arith.constant 0 : i32
    %c0_i32_0 = arith.constant 0 : i32
    %c0_i32_1 = arith.constant 0 : i32
    return %c0_i32, %c0_i32_0 : i32, i32
  }
  func.func @transform_3(%arg0: i32) -> (i32, i32) {
    %c0_i32 = arith.constant 0 : i32
    %c0_i32_0 = arith.constant 0 : i32
    %c0_i32_1 = arith.constant 0 : i32
    return %c0_i32, %c0_i32_0 : i32, i32
  }
  func.func @transform_4(%arg0: i32) -> (i32, i32) {
    %c0_i32 = arith.constant 0 : i32
    %c0_i32_0 = arith.constant 0 : i32
    %c0_i32_1 = arith.constant 0 : i32
    return %c0_i32, %c0_i32_0 : i32, i32
  }
  func.func @transform_5(%arg0: i32) -> (i32, i32) {
    %c0_i32 = arith.constant 0 : i32
    %c0_i32_0 = arith.constant 0 : i32
    return %arg0, %c0_i32 : i32, i32
  }
}

</mosaic_0001>

<llo_original>
// kernel: tpu_custom_call.1
$region0: #{tpu_custom_call.1}
  #allocation0 [shape = 'u32[]', space=smem, size = 0x4, offset = 0x4, fixed_abs, tag = 'smem constant byte address 0x4 - core index']
  #allocation1 [shape = 'u32[144,128]{1,0:T(1,128)}', space=vmem, size = 0x12000, scoped, tag = 'internal scratch']
  %s0 = inlined_call_operand.vmem [shape: f32[16,81], index: 0, kind: input, shape index: {}]
  %s1 = inlined_call_operand.vmem [shape: f32[81,32], index: 1, kind: input, shape index: {}]
  %s2 = inlined_call_operand.vmem [shape: f32[1,32], index: 2, kind: input, shape index: {}]
  %s3 = inlined_call_operand.vmem [shape: f32[32,128], index: 3, kind: input, shape index: {}]
  %s4 = inlined_call_operand.vmem [shape: f32[1,128], index: 4, kind: input, shape index: {}]
  %s5 = inlined_call_operand.hbm [shape: f32[16,128], index: 5, kind: output, shape index: {}]
  %s6 = sld [smem:[#allocation0]]
  $region30: #{tpu_custom_call.1} parent=0
    _
  %s8 = ssub.s32 1, %s6
  %s9 = scalar_select 0, %s8, %s6
  $region1: #{tpu_custom_call.1} parent=0
    #allocation2 [shape = 'u8[8192]{0}', space=vmem, size = 0x2000, scoped, tag = 'output window, operand 0, single buffered']
    #allocation3 [shape = 's32[1]{0}', space=sflag, size = 0x4, scoped, tag = 'scoped memory for tpu_custom_call.1']
    %10 = vsyncpa [#allocation3], 0
    // Predicated region
    $region2: #{tpu_custom_call.1} parent=1 // pred_check
      _
    $region3: #{tpu_custom_call.1} parent=1 // pred_check_branch
      %12 = sbr.rel (0) target = $region5
    $region4: #{tpu_custom_call.1} parent=1 // pred_region
      _
    $region5: #{tpu_custom_call.1} parent=1 // pred_fallthru
      _
    // Predicated region
    $region6: #{tpu_custom_call.1} parent=1 // pred_check
      _
    $region7: #{tpu_custom_call.1} parent=1 // pred_check_branch
      %14 = sbr.rel (0) target = $region9
    $region8: #{tpu_custom_call.1} parent=1 // pred_region
      _
    $region9: #{tpu_custom_call.1} parent=1 // pred_fallthru
      _
    // Predicated region
    $region10: #{tpu_custom_call.1} parent=1 // pred_check
      _
    $region11: #{tpu_custom_call.1} parent=1 // pred_check_branch
      %16 = sbr.rel (0) target = $region13
    $region12: #{tpu_custom_call.1} parent=1 // pred_region
      _
    $region13: #{tpu_custom_call.1} parent=1 // pred_fallthru
      _
    // Predicated region
    $region14: #{tpu_custom_call.1} parent=1 // pred_check
      _
    $region15: #{tpu_custom_call.1} parent=1 // pred_check_branch
      %18 = sbr.rel (0) target = $region17
    $region16: #{tpu_custom_call.1} parent=1 // pred_region
      _
    $region17: #{tpu_custom_call.1} parent=1 // pred_fallthru
      _
    // Predicated region
    $region18: #{tpu_custom_call.1} parent=1 // pred_check
      _
    $region19: #{tpu_custom_call.1} parent=1 // pred_check_branch
      %20 = sbr.rel (0) target = $region21
    $region20: #{tpu_custom_call.1} parent=1 // pred_region
      _
    $region21: #{tpu_custom_call.1} parent=1 // pred_fallthru
      _
    %v21 = vld [vmem:[%s0] sm:$0xff]
    %v22 = vld [vmem:[%s0 + $0x8] sm:$0xff]
    %v23 = vld [vmem:[%s1] sm:$0xff]
    %v24 = vld [vmem:[%s1 + $0x8] sm:$0xff]
    %v25 = vld [vmem:[%s1 + $0x10] sm:$0xff]
    %v26 = vld [vmem:[%s1 + $0x18] sm:$0xff]
    %v27 = vld [vmem:[%s1 + $0x20] sm:$0xff]
    %v28 = vld [vmem:[%s1 + $0x28] sm:$0xff]
    %v29 = vld [vmem:[%s1 + $0x30] sm:$0xff]
    %v30 = vld [vmem:[%s1 + $0x38] sm:$0xff]
    %v31 = vld [vmem:[%s1 + $0x40] sm:$0xff]
    %v32 = vld [vmem:[%s1 + $0x48] sm:$0xff]
    %v33 = vld [vmem:[%s1 + $0x50] sm:$0x1]
    %v34 = vld [vmem:[%s2] sm:$0x1]
    %v36 = vlaneseq
    %v37 = vshrl.u32 %v36, 7
    %v38 = vsub.s32 0, %v37
    %v39 = vrot.slane %v34, %v38
    %vm41 = vcmask 662528
    %v43 = vsel %vm41, %v21, 0
    %v46 = vsel %vm41, %v22, 0
    %vm48 = vcmask 1040384
    %v50 = vsel %vm48, %v33, 0
    %52 = vmatprep.subr.mxu0 0.0
    %53 = vmatpush1.msra.mxu0 %v23
    %54 = vmatprep.subr.mxu0 0.0
    %55 = vmatpush1.msra.mxu0 %v24
    %56 = vmatprep.subr.mxu0 0.0
    %57 = vmatpush1.msra.mxu0 %v25
    %58 = vmatprep.subr.mxu0 0.0
    %59 = vmatpush1.msra.mxu0 %v26
    %60 = vmatprep.subr.mxu0 0.0
    %61 = vmatpush1.msra.mxu0 %v27
    %62 = vmatprep.subr.mxu0 0.0
    %63 = vmatpush1.msra.mxu0 %v28
    %64 = vmatprep.subr.mxu0 0.0
    %65 = vmatpush1.msra.mxu0 %v29
    %66 = vmatprep.subr.mxu0 0.0
    %67 = vmatpush1.msra.mxu0 %v30
    %68 = vmatprep.subr.mxu0 0.0
    %69 = vmatpush1.msra.mxu0 %v31
    %70 = vmatprep.subr.mxu0 0.0
    %71 = vmatpush1.msra.mxu0 %v32
    %72 = vmatprep.subr.mxu0 0.0
    %73 = vmatpush1.msra.mxu0 %v50
    %74 = vmatprep.subr.mxu0 0.0
    %75 = vmatpush1.msra.mxu0 0.0
    %76 = vmatprep.subr.mxu0 0.0
    %77 = vmatpush1.msra.mxu0 0.0
    %78 = vmatprep.subr.mxu0 0.0
    %79 = vmatpush1.msra.mxu0 0.0
    %80 = vmatprep.subr.mxu0 0.0
    %81 = vmatpush1.msra.mxu0 0.0
    %82 = vmatprep.subr.mxu0 0.0
    %83 = vmatpush1.msra.mxu0 0.0
    %84 = vmatprep.subr.mxu0 0.0
    %85 = vmatpush1.msra.mxu0 0.0
    %86 = vmatprep.subr.mxu0 0.0
    %87 = vmatpush1.msra.mxu0 0.0
    %88 = vmatprep.subr.mxu0 0.0
    %89 = vmatpush1.msra.mxu0 0.0
    %90 = vmatprep.subr.mxu0 0.0
    %91 = vmatpush1.msra.mxu0 0.0
    %92 = vmatprep.subr.mxu0 0.0
    %93 = vmatpush1.msra.mxu0 0.0
    %94 = vmatprep.subr.mxu0 0.0
    %95 = vmatpush1.msra.mxu0 0.0
    %96 = vmatprep.subr.mxu0 0.0
    %97 = vmatpush1.msra.mxu0 0.0
    %98 = vmatprep.subr.mxu0 0.0
    %99 = vmatpush1.msra.mxu0 0.0
    %100 = vmatprep.subr.mxu0 0.0
    %101 = vmatpush1.msra.mxu0 0.0
    %102 = vmatprep.subr.mxu0 0.0
    %103 = vmatpush1.msra.mxu0 0.0
    %104 = vmatprep.subr.mxu0 0.0
    %105 = vmatpush1.msra.mxu0 0.0
    %106 = vmatprep.subr.mxu0 0.0
    %107 = vmatpush1.msra.mxu0 0.0
    %108 = vmatprep.subr.mxu0 0.0
    %109 = vmatpush1.msra.mxu0 0.0
    %110 = vmatprep.subr.mxu0 0.0
    %111 = vmatpush1.msra.mxu0 0.0
    %112 = vmatprep.subr.mxu0 0.0
    %113 = vmatpush1.msra.mxu0 0.0
    %114 = vmatprep.subr.mxu0 0.0
    %115 = vmatpush1.msra.mxu0 0.0
    %116 = vmatprep.mubr.f32.mxu0 0.0
    %117 = vmatmul.mubr.f32.gmra.mrb[0].mxu0 %v43
    %v118 = vpop.f32.mrb[0].mxu0
    %v119 = vadd.f32 %v39, %v118
    %v120 = vpop.f32.mrb[0].mxu0
    %121 = vmatprep.mubr.f32.mxu0 0.0
    %122 = vmatmul.mubr.f32.gmra.mrb[0].mxu0 %v46
    %v123 = vpop.f32.mrb[0].mxu0
    %v124 = vadd.f32 %v39, %v123
    %v125 = vpop.f32.mrb[0].mxu0
    %126 = vdwg.mxu0
    %vm127 = vcmp.gt.f32.partialorder %v119, 0.0
    %vm128 = vcmp.gt.f32.partialorder %v124, 0.0
    %v129 = vmul.f32 %v119, 0.2
    %v130 = vmul.f32 %v124, 0.2
    %v131 = vsel %vm127, %v119, %v129
    %v132 = vsel %vm128, %v124, %v130
    %v133 = vld [vmem:[%s3] sm:$0xff]
    %v134 = vld [vmem:[%s3 + $0x8] sm:$0xff]
    %v135 = vld [vmem:[%s3 + $0x10] sm:$0xff]
    %v136 = vld [vmem:[%s3 + $0x18] sm:$0xff]
    %v137 = vld [vmem:[%s4] sm:$0x1]
    %v139 = vlaneseq
    %v140 = vshrl.u32 %v139, 7
    %v141 = vsub.s32 0, %v140
    %v142 = vrot.slane %v137, %v141
    %vm144 = vcmask 261120
    %v146 = vsel %vm144, %v131, 0
    %v149 = vsel %vm144, %v132, 0
    %151 = vmatprep.subr.mxu0 0.0
    %152 = vmatpush1.msra.mxu0 %v133
    %153 = vmatprep.subr.mxu0 0.0
    %154 = vmatpush1.msra.mxu0 %v134
    %155 = vmatprep.subr.mxu0 0.0
    %156 = vmatpush1.msra.mxu0 %v135
    %157 = vmatprep.subr.mxu0 0.0
    %158 = vmatpush1.msra.mxu0 %v136
    %159 = vmatprep.subr.mxu0 0.0
    %160 = vmatpush1.msra.mxu0 0.0
    %161 = vmatprep.subr.mxu0 0.0
    %162 = vmatpush1.msra.mxu0 0.0
    %163 = vmatprep.subr.mxu0 0.0
    %164 = vmatpush1.msra.mxu0 0.0
    %165 = vmatprep.subr.mxu0 0.0
    %166 = vmatpush1.msra.mxu0 0.0
    %167 = vmatprep.subr.mxu0 0.0
    %168 = vmatpush1.msra.mxu0 0.0
    %169 = vmatprep.subr.mxu0 0.0
    %170 = vmatpush1.msra.mxu0 0.0
    %171 = vmatprep.subr.mxu0 0.0
    %172 = vmatpush1.msra.mxu0 0.0
    %173 = vmatprep.subr.mxu0 0.0
    %174 = vmatpush1.msra.mxu0 0.0
    %175 = vmatprep.subr.mxu0 0.0
    %176 = vmatpush1.msra.mxu0 0.0
    %177 = vmatprep.subr.mxu0 0.0
    %178 = vmatpush1.msra.mxu0 0.0
    %179 = vmatprep.subr.mxu0 0.0
    %180 = vmatpush1.msra.mxu0 0.0
    %181 = vmatprep.subr.mxu0 0.0
    %182 = vmatpush1.msra.mxu0 0.0
    %183 = vmatprep.subr.mxu0 0.0
    %184 = vmatpush1.msra.mxu0 0.0
    %185 = vmatprep.subr.mxu0 0.0
    %186 = vmatpush1.msra.mxu0 0.0
    %187 = vmatprep.subr.mxu0 0.0
    %188 = vmatpush1.msra.mxu0 0.0
    %189 = vmatprep.subr.mxu0 0.0
    %190 = vmatpush1.msra.mxu0 0.0
    %191 = vmatprep.subr.mxu0 0.0
    %192 = vmatpush1.msra.mxu0 0.0
    %193 = vmatprep.subr.mxu0 0.0
    %194 = vmatpush1.msra.mxu0 0.0
    %195 = vmatprep.subr.mxu0 0.0
    %196 = vmatpush1.msra.mxu0 0.0
    %197 = vmatprep.subr.mxu0 0.0
    %198 = vmatpush1.msra.mxu0 0.0
    %199 = vmatprep.subr.mxu0 0.0
    %200 = vmatpush1.msra.mxu0 0.0
    %201 = vmatprep.subr.mxu0 0.0
    %202 = vmatpush1.msra.mxu0 0.0
    %203 = vmatprep.subr.mxu0 0.0
    %204 = vmatpush1.msra.mxu0 0.0
    %205 = vmatprep.subr.mxu0 0.0
    %206 = vmatpush1.msra.mxu0 0.0
    %207 = vmatprep.subr.mxu0 0.0
    %208 = vmatpush1.msra.mxu0 0.0
    %209 = vmatprep.subr.mxu0 0.0
    %210 = vmatpush1.msra.mxu0 0.0
    %211 = vmatprep.subr.mxu0 0.0
    %212 = vmatpush1.msra.mxu0 0.0
    %213 = vmatprep.subr.mxu0 0.0
    %214 = vmatpush1.msra.mxu0 0.0
    %215 = vmatprep.mubr.f32.mxu0 0.0
    %216 = vmatmul.mubr.f32.gmra.mrb[0].mxu0 %v146
    %v217 = vpop.f32.mrb[0].mxu0
    %v218 = vadd.f32 %v142, %v217
    %v219 = vpop.f32.mrb[0].mxu0
    %220 = vmatprep.mubr.f32.mxu0 0.0
    %221 = vmatmul.mubr.f32.gmra.mrb[0].mxu0 %v149
    %v222 = vpop.f32.mrb[0].mxu0
    %v223 = vadd.f32 %v142, %v222
    %v224 = vpop.f32.mrb[0].mxu0
    %225 = vdwg.mxu0
    %v226 = vxor.u32 %v218, 2147483648
    %v227 = vxor.u32 %v223, 2147483648
    %v228 = vmul.f32 %v226, 1.442695
    %v229 = vpow.pop %v228
    %v230 = vmul.f32 %v227, 1.442695
    %v231 = vpow.pop %v230
    %v232 = vadd.f32 %v229, 1.0
    %v233 = vadd.f32 %v231, 1.0
    %v234 = vrcp.pop %v232
    %v235 = vmul.f32 1.0, %v234
    %v236 = vrcp.pop %v233
    %v237 = vmul.f32 1.0, %v236
    %v238 = vmax.f32 %v235, 1e-30
    %v239 = vmax.f32 %v237, 1e-30
    %v240 = vlog2.pop %v238
    %v241 = vmul.f32 %v240, 0.6931472
    %v242 = vlog2.pop %v239
    %v243 = vmul.f32 %v242, 0.6931472
    %v244 = vmul.f32 %v241, 2.3025851
    %v245 = vmul.f32 %v243, 2.3025851
    %v246 = vmul.f32 %v244, 1.442695
    %v247 = vpow.pop %v246
    %v248 = vmul.f32 %v245, 1.442695
    %v249 = vpow.pop %v248
    %v250 = vmul.f32 %v247, 2.0
    %v251 = vmul.f32 %v249, 2.0
    %v252 = vadd.f32 %v250, 1e-07
    %v253 = vadd.f32 %v251, 1e-07
    %v254 = vlaneseq
    %v255 = vand.u32 %v254, 127
    %vm256 = vcmp.eq.s32.totalorder %v255, 0
    %vm257 = vcmp.ge.s32.totalorder %v255, 1
    %vm258 = vcmp.lt.s32.totalorder %v255, 17
    %vm259 = vmand %vm257, %vm258
    %v260 = vsel %vm256, %v252, 0.0
    %v261 = vsel %vm256, %v253, 0.0
    %262 = vadd.xlane.f32.xlu0 %v260
    %v263 = vpop.xlane.xlu0 %262
    %264 = vadd.xlane.f32.xlu0 %v261
    %v265 = vpop.xlane.xlu0 %264
    %v266 = vsel %vm259, %v252, 0.0
    %v267 = vsel %vm259, %v253, 0.0
    %268 = vadd.xlane.f32.xlu0 %v266
    %v269 = vpop.xlane.xlu0 %268
    %270 = vadd.xlane.f32.xlu0 %v267
    %v271 = vpop.xlane.xlu0 %270
    %v272 = vrcp.pop %v269
    %v273 = vmul.f32 %v263, %v272
    %v274 = vrcp.pop %v271
    %v275 = vmul.f32 %v265, %v274
    %v276 = vsel %vm259, %v273, 1.0
    %v277 = vsel %vm259, %v275, 1.0
    %v278 = vmul.f32 %v252, %v276
    %v279 = vmul.f32 %v253, %v277
    %280 = vst [vmem:[#allocation2] sm:$0xff] %v278
    %281 = vst [vmem:[#allocation2 + $0x8] sm:$0xff] %v279
    // Predicated region
    $region22: #{tpu_custom_call.1} parent=1 // pred_check
      _
    $region23: #{tpu_custom_call.1} parent=1 // pred_check_branch
      %283 = sbr.rel (0) target = $region25
    $region24: #{tpu_custom_call.1} parent=1 // pred_region
      %s285 = ssub.s32 256, 256
      %286 = vsyncadd [#allocation3], %s285
      %s287 = sshll.u32 [#allocation2], 4
      %s288 = int_to_ptr.vmem [resolvable:$true] %s287
      %293 = dma.vmem_to_hbm [thread:$0]  %s288, 256, %s5, [#allocation3], 128, 128, 8
    $region25: #{tpu_custom_call.1} parent=1 // pred_fallthru
      _
    // Predicated region
    $region26: #{tpu_custom_call.1} parent=1 // pred_check
      _
    $region27: #{tpu_custom_call.1} parent=1 // pred_check_branch
      %295 = sbr.rel (0) target = $region29
    $region28: #{tpu_custom_call.1} parent=1 // pred_region
      %296 = dma.done [#allocation3], 256
    $region29: #{tpu_custom_call.1} parent=1 // pred_fallthru
      _
    %297 = vsyncpa [#allocation3], 1

</llo_original>
